<compile_context>
chip_gen: v5e
topology: v5e:2x2
jax: 0.10.0
libtpu: 0.0.40
codegen_flags: <defaults>
</compile_context>

<pallas_src>
import functools
import math

import jax
import jax.numpy as jnp
from jax.experimental import pallas as pl
from jax.experimental.pallas import tpu as pltpu

FP16_MAX_VALUE = float(jnp.finfo(jnp.float16).max) - 1.0


def _dft_matrices(n, dtype):
    """cos / sin parts of the DFT matrix F[k, m] = exp(-2i*pi*k*m/n)."""
    k = jnp.arange(n, dtype=jnp.int32)
    km = (k[:, None] * k[None, :]) % n          # exact in int32 for n <= 46340
    ang = km.astype(jnp.float32) * jnp.float32(2.0 * jnp.pi / n)
    return jnp.cos(ang).astype(dtype), jnp.sin(ang).astype(dtype)


def _pick_group(bc, h, w, in_bytes):
    """Number of (H, W) slices processed per grid step."""
    g = max(1, -(-256 // w))                    # lane-density target: g*w >= 256
    g = min(g, 32)                              # bound the unrolled lane concats
    # VMEM budget: 2 inputs x 2 pipeline buffers + f32/compute temporaries.
    per_slice = h * w * (4 * in_bytes + 28)
    g = min(g, max(1, (12 * 1024 * 1024) // per_slice))
    g = max(1, min(g, bc))
    # Prefer a divisor of bc: avoids a jnp.pad copy of x and t in the wrapper.
    for d in range(g, 0, -1):
        if bc % d == 0:
            if 2 * d >= g:
                return d
            break
    return g


def _fft_abs_sum_kernel(x_ref, t_ref, ch_ref, sh_ref, cw_ref, sw_ref, o_ref, *,
                        compute_dtype):
    g, h, w = x_ref.shape
    hr = ch_ref.shape[0]                        # h // 2 + 1
    f32 = jnp.float32

    def mm(a, b):
        return jnp.dot(a, b, preferred_element_type=f32)

    # FFT2 is linear: FFT2(x) - FFT2(t) == FFT2(x - t).  Subtract in f32, then
    # cast once so all relayouts below move 16-bit data (for bf16 compute).
    d = (x_ref[...].astype(f32) - t_ref[...].astype(f32)).astype(compute_dtype)

    # Lane-concatenate the G slices -> (H, G*W): the H-axis DFT becomes a
    # single lane-dense left-multiply.
    dt = jnp.concatenate([d[i] for i in range(g)], axis=1)

    # Stage 1: DFT along H, non-negative frequencies only (rows 0..H//2).
    c_hr, s_hr = ch_ref[...], sh_ref[...]       # (Hr, H)
    yr = mm(c_hr, dt)                           # (Hr, G*W) f32
    yi = -mm(s_hr, dt)

    # Re-stack per-slice column blocks on sublanes -> (G*Hr, W) so the W-axis
    # DFT is a single right-multiply.  Cast first (relayout in 16-bit).
    yr = yr.astype(compute_dtype)
    yi = yi.astype(compute_dtype)
    yr2 = jnp.concatenate([yr[:, i * w:(i + 1) * w] for i in range(g)], axis=0)
    yi2 = jnp.concatenate([yi[:, i * w:(i + 1) * w] for i in range(g)], axis=0)

    # Stage 2: DFT along W.
    c_w, s_w = cw_ref[...], sw_ref[...]         # (W, W)
    xr = mm(yr2, c_w) + mm(yi2, s_w)            # (G*Hr, W) f32
    xi = mm(yi2, c_w) - mm(yr2, s_w)

    p = jnp.abs(xr) + jnp.abs(xi)

    # Hermitian row weights: within each slice, row k == 0 (DC) and row
    # k == H/2 (Nyquist, H even) count once; every other retained row stands
    # in for its conjugate-mirror row and counts twice.
    k = jax.lax.broadcasted_iota(jnp.int32, (hr, 1), 0)
    once = k == 0
    if h % 2 == 0:
        once = once | (k == hr - 1)
    wt = jnp.where(once, jnp.float32(1.0), jnp.float32(2.0))
    if g > 1:
        wt = jnp.concatenate([wt] * g, axis=0)  # (G*Hr, 1)

    # Lane-dense per-block partial sums; the cross-lane reduction and the mean
    # are finished in the wrapper (keeps the hot loop free of scalar reduces /
    # masked single-lane stores and keeps the grid axis "parallel").
    o_ref[0] = jnp.sum(p * wt, axis=0, keepdims=True)       # (1, W)


@functools.partial(jax.jit, static_argnames=("norm", "compute_dtype"))
def fft_loss(inp, target, norm="backward", compute_dtype=jnp.bfloat16):
    """Pallas TPU implementation of fft_loss."""
    assert inp.shape == target.shape and inp.ndim >= 2
    orig_dtype = inp.dtype
    is_fp16 = orig_dtype == jnp.float16

    H, W = inp.shape[-2], inp.shape[-1]
    BC = max(1, math.prod(inp.shape[:-2]))
    x = inp.reshape(BC, H, W)
    t = target.reshape(BC, H, W)

    G = _pick_group(BC, H, W, jnp.dtype(orig_dtype).itemsize)
    pad = (-BC) % G
    if pad:  # zero slices contribute exactly zero to the sum
        x = jnp.pad(x, ((0, pad), (0, 0), (0, 0)))
        t = jnp.pad(t, ((0, pad), (0, 0), (0, 0)))
    nb = (BC + pad) // G

    Hr = H // 2 + 1
    c_h, s_h = _dft_matrices(H, compute_dtype)
    c_w, s_w = _dft_matrices(W, compute_dtype)
    c_hr, s_hr = c_h[:Hr], s_h[:Hr]

    kernel = functools.partial(_fft_abs_sum_kernel, compute_dtype=compute_dtype)

    partials = pl.pallas_call(
        kernel,
        out_shape=jax.ShapeDtypeStruct((nb, 1, W), jnp.float32),
        grid_spec=pltpu.PrefetchScalarGridSpec(
            num_scalar_prefetch=0,
            grid=(nb,),
            in_specs=[
                pl.BlockSpec((G, H, W), lambda i: (i, 0, 0)),
                pl.BlockSpec((G, H, W), lambda i: (i, 0, 0)),
                # DFT matrices: constant block index -> stay resident in VMEM.
                pl.BlockSpec((Hr, H), lambda i: (0, 0)),
                pl.BlockSpec((Hr, H), lambda i: (0, 0)),
                pl.BlockSpec((W, W), lambda i: (0, 0)),
                pl.BlockSpec((W, W), lambda i: (0, 0)),
            ],
            out_specs=pl.BlockSpec((1, 1, W), lambda i: (i, 0, 0)),
        ),
        compiler_params=pltpu.CompilerParams(
            dimension_semantics=("parallel",),
            vmem_limit_bytes=48 * 1024 * 1024,
        ),
    )(x, t, c_hr, s_hr, c_w, s_w)

    total = jnp.sum(partials)

    if norm == "backward":
        scale = 1.0
    elif norm == "ortho":
        scale = 1.0 / math.sqrt(H * W)
    elif norm == "forward":
        scale = 1.0 / float(H * W)
    else:
        raise ValueError(f"unknown norm: {norm}")

    # L1 loss over the stacked [real, imag] tensor => mean over 2*B*C*H*W elems.
    loss = total * jnp.float32(scale) / jnp.float32(BC * H * W * 2)

    if is_fp16:
        loss = jnp.clip(loss, -FP16_MAX_VALUE, FP16_MAX_VALUE).astype(jnp.float16)
    return loss


class FFTLoss:
    """Mirror of the PyTorch FFTLoss module."""

    def __init__(self, norm="backward", compute_dtype=jnp.bfloat16):
        self.norm = norm
        self.compute_dtype = compute_dtype

    def __call__(self, inp, target):
        return fft_loss(inp, target, norm=self.norm,
                        compute_dtype=self.compute_dtype)


def _reference_fft_loss(inp, target, norm="backward"):
    xi = jnp.fft.fft2(inp.astype(jnp.float32), norm=norm, axes=(-2, -1))
    xt = jnp.fft.fft2(target.astype(jnp.float32), norm=norm, axes=(-2, -1))
    a = jnp.stack([xi.real, xi.imag], axis=-1)
    b = jnp.stack([xt.real, xt.imag], axis=-1)
    return jnp.mean(jnp.abs(a - b))


if __name__ == "__main__":
    key = jax.random.PRNGKey(0)
    k1, k2 = jax.random.split(key)
    B, C, H, W = 2, 4, 16, 16
    x = jax.random.normal(k1, (B, C, H, W), dtype=jnp.float32)
    t = jax.random.normal(k2, (B, C, H, W), dtype=jnp.float32)

    loss_mod = FFTLoss(norm="backward")
    loss = loss_mod(x, t)
    jax.block_until_ready(loss)

    ref = _reference_fft_loss(x, t)
    assert jnp.allclose(loss, ref, rtol=1e-2, atol=1e-2), (loss, ref)

    print("KERNEL_OK")
</pallas_src>

<mosaic_0001>
module attributes {stable_mosaic.version = 11 : i64} {
  func.func @_fft_abs_sum_kernel(%arg0: i32, %arg1: memref<8x16x16xf32, #tpu.memory_space<vmem>>, %arg2: memref<8x16x16xf32, #tpu.memory_space<vmem>>, %arg3: memref<9x16xbf16, #tpu.memory_space<vmem>>, %arg4: memref<9x16xbf16, #tpu.memory_space<vmem>>, %arg5: memref<16x16xbf16, #tpu.memory_space<vmem>>, %arg6: memref<16x16xbf16, #tpu.memory_space<vmem>>, %arg7: memref<1x1x16xf32, #tpu.memory_space<vmem>>) attributes {dimension_semantics = [#tpu.dimension_semantics<parallel>], iteration_bounds = array<i64: 1>, scalar_prefetch = 0 : i64, scratch_operands = 0 : i64, tpu.core_type = #tpu.core_type<tc>, window_params = [{transform_indices = @transform_0, window_bounds = array<i64: 8, 16, 16>}, {transform_indices = @transform_1, window_bounds = array<i64: 8, 16, 16>}, {pipeline_mode = #tpu.pipeline_mode<synchronous>, transform_indices = @transform_2, window_bounds = array<i64: 9, 16>}, {pipeline_mode = #tpu.pipeline_mode<synchronous>, transform_indices = @transform_3, window_bounds = array<i64: 9, 16>}, {pipeline_mode = #tpu.pipeline_mode<synchronous>, transform_indices = @transform_4, window_bounds = array<i64: 16, 16>}, {pipeline_mode = #tpu.pipeline_mode<synchronous>, transform_indices = @transform_5, window_bounds = array<i64: 16, 16>}, {transform_indices = @transform_6, window_bounds = array<i64: 1, 1, 16>}]} {
    %c0 = arith.constant 0 : index
    %c0_0 = arith.constant 0 : index
    %c0_1 = arith.constant 0 : index
    %0 = vector.load %arg1[%c0, %c0_0, %c0_1] : memref<8x16x16xf32, #tpu.memory_space<vmem>>, vector<8x16x16xf32>
    %c0_2 = arith.constant 0 : index
    %c0_3 = arith.constant 0 : index
    %c0_4 = arith.constant 0 : index
    %1 = vector.load %arg2[%c0_2, %c0_3, %c0_4] : memref<8x16x16xf32, #tpu.memory_space<vmem>>, vector<8x16x16xf32>
    %2 = arith.subf %0, %1 : vector<8x16x16xf32>
    %3 = arith.truncf %2 : vector<8x16x16xf32> to vector<8x16x16xbf16>
    %4 = vector.extract_strided_slice %3 {offsets = [0, 0, 0], sizes = [1, 16, 16], strides = [1, 1, 1]} : vector<8x16x16xbf16> to vector<1x16x16xbf16>
    %5 = vector.shape_cast %4 : vector<1x16x16xbf16> to vector<16x16xbf16>
    %6 = vector.extract_strided_slice %3 {offsets = [1, 0, 0], sizes = [1, 16, 16], strides = [1, 1, 1]} : vector<8x16x16xbf16> to vector<1x16x16xbf16>
    %7 = vector.shape_cast %6 : vector<1x16x16xbf16> to vector<16x16xbf16>
    %8 = vector.extract_strided_slice %3 {offsets = [2, 0, 0], sizes = [1, 16, 16], strides = [1, 1, 1]} : vector<8x16x16xbf16> to vector<1x16x16xbf16>
    %9 = vector.shape_cast %8 : vector<1x16x16xbf16> to vector<16x16xbf16>
    %10 = vector.extract_strided_slice %3 {offsets = [3, 0, 0], sizes = [1, 16, 16], strides = [1, 1, 1]} : vector<8x16x16xbf16> to vector<1x16x16xbf16>
    %11 = vector.shape_cast %10 : vector<1x16x16xbf16> to vector<16x16xbf16>
    %12 = vector.extract_strided_slice %3 {offsets = [4, 0, 0], sizes = [1, 16, 16], strides = [1, 1, 1]} : vector<8x16x16xbf16> to vector<1x16x16xbf16>
    %13 = vector.shape_cast %12 : vector<1x16x16xbf16> to vector<16x16xbf16>
    %14 = vector.extract_strided_slice %3 {offsets = [5, 0, 0], sizes = [1, 16, 16], strides = [1, 1, 1]} : vector<8x16x16xbf16> to vector<1x16x16xbf16>
    %15 = vector.shape_cast %14 : vector<1x16x16xbf16> to vector<16x16xbf16>
    %16 = vector.extract_strided_slice %3 {offsets = [6, 0, 0], sizes = [1, 16, 16], strides = [1, 1, 1]} : vector<8x16x16xbf16> to vector<1x16x16xbf16>
    %17 = vector.shape_cast %16 : vector<1x16x16xbf16> to vector<16x16xbf16>
    %18 = vector.extract_strided_slice %3 {offsets = [7, 0, 0], sizes = [1, 16, 16], strides = [1, 1, 1]} : vector<8x16x16xbf16> to vector<1x16x16xbf16>
    %19 = vector.shape_cast %18 : vector<1x16x16xbf16> to vector<16x16xbf16>
    %20 = tpu.concatenate %5, %7, %9, %11, %13, %15, %17, %19 in 1 : vector<16x16xbf16>, vector<16x16xbf16>, vector<16x16xbf16>, vector<16x16xbf16>, vector<16x16xbf16>, vector<16x16xbf16>, vector<16x16xbf16>, vector<16x16xbf16> -> vector<16x128xbf16>
    %c0_5 = arith.constant 0 : index
    %c0_6 = arith.constant 0 : index
    %21 = vector.load %arg3[%c0_5, %c0_6] : memref<9x16xbf16, #tpu.memory_space<vmem>>, vector<9x16xbf16>
    %c0_7 = arith.constant 0 : index
    %c0_8 = arith.constant 0 : index
    %22 = vector.load %arg4[%c0_7, %c0_8] : memref<9x16xbf16, #tpu.memory_space<vmem>>, vector<9x16xbf16>
    %cst = arith.constant dense<0.000000e+00> : vector<9x128xf32>
    %23 = tpu.matmul %21, %20, %cst {dimension_numbers = #tpu.dot_dimension_numbers<[1], [0], [0], [1], [0, 0, 1, 1], [], []>} : vector<9x16xbf16>, vector<16x128xbf16>, vector<9x128xf32> -> vector<9x128xf32>
    %cst_9 = arith.constant dense<0.000000e+00> : vector<9x128xf32>
    %24 = tpu.matmul %22, %20, %cst_9 {dimension_numbers = #tpu.dot_dimension_numbers<[1], [0], [0], [1], [0, 0, 1, 1], [], []>} : vector<9x16xbf16>, vector<16x128xbf16>, vector<9x128xf32> -> vector<9x128xf32>
    %cst_10 = arith.constant 0.000000e+00 : f32
    %25 = vector.broadcast %cst_10 : f32 to vector<9x128xf32>
    %26 = arith.subf %25, %24 : vector<9x128xf32>
    %27 = arith.truncf %23 : vector<9x128xf32> to vector<9x128xbf16>
    %28 = arith.truncf %26 : vector<9x128xf32> to vector<9x128xbf16>
    %29 = vector.extract_strided_slice %27 {offsets = [0, 0], sizes = [9, 16], strides = [1, 1]} : vector<9x128xbf16> to vector<9x16xbf16>
    %30 = vector.extract_strided_slice %27 {offsets = [0, 16], sizes = [9, 16], strides = [1, 1]} : vector<9x128xbf16> to vector<9x16xbf16>
    %31 = vector.extract_strided_slice %27 {offsets = [0, 32], sizes = [9, 16], strides = [1, 1]} : vector<9x128xbf16> to vector<9x16xbf16>
    %32 = vector.extract_strided_slice %27 {offsets = [0, 48], sizes = [9, 16], strides = [1, 1]} : vector<9x128xbf16> to vector<9x16xbf16>
    %33 = vector.extract_strided_slice %27 {offsets = [0, 64], sizes = [9, 16], strides = [1, 1]} : vector<9x128xbf16> to vector<9x16xbf16>
    %34 = vector.extract_strided_slice %27 {offsets = [0, 80], sizes = [9, 16], strides = [1, 1]} : vector<9x128xbf16> to vector<9x16xbf16>
    %35 = vector.extract_strided_slice %27 {offsets = [0, 96], sizes = [9, 16], strides = [1, 1]} : vector<9x128xbf16> to vector<9x16xbf16>
    %36 = vector.extract_strided_slice %27 {offsets = [0, 112], sizes = [9, 16], strides = [1, 1]} : vector<9x128xbf16> to vector<9x16xbf16>
    %37 = tpu.concatenate %29, %30, %31, %32, %33, %34, %35, %36 in 0 : vector<9x16xbf16>, vector<9x16xbf16>, vector<9x16xbf16>, vector<9x16xbf16>, vector<9x16xbf16>, vector<9x16xbf16>, vector<9x16xbf16>, vector<9x16xbf16> -> vector<72x16xbf16>
    %38 = vector.extract_strided_slice %28 {offsets = [0, 0], sizes = [9, 16], strides = [1, 1]} : vector<9x128xbf16> to vector<9x16xbf16>
    %39 = vector.extract_strided_slice %28 {offsets = [0, 16], sizes = [9, 16], strides = [1, 1]} : vector<9x128xbf16> to vector<9x16xbf16>
    %40 = vector.extract_strided_slice %28 {offsets = [0, 32], sizes = [9, 16], strides = [1, 1]} : vector<9x128xbf16> to vector<9x16xbf16>
    %41 = vector.extract_strided_slice %28 {offsets = [0, 48], sizes = [9, 16], strides = [1, 1]} : vector<9x128xbf16> to vector<9x16xbf16>
    %42 = vector.extract_strided_slice %28 {offsets = [0, 64], sizes = [9, 16], strides = [1, 1]} : vector<9x128xbf16> to vector<9x16xbf16>
    %43 = vector.extract_strided_slice %28 {offsets = [0, 80], sizes = [9, 16], strides = [1, 1]} : vector<9x128xbf16> to vector<9x16xbf16>
    %44 = vector.extract_strided_slice %28 {offsets = [0, 96], sizes = [9, 16], strides = [1, 1]} : vector<9x128xbf16> to vector<9x16xbf16>
    %45 = vector.extract_strided_slice %28 {offsets = [0, 112], sizes = [9, 16], strides = [1, 1]} : vector<9x128xbf16> to vector<9x16xbf16>
    %46 = tpu.concatenate %38, %39, %40, %41, %42, %43, %44, %45 in 0 : vector<9x16xbf16>, vector<9x16xbf16>, vector<9x16xbf16>, vector<9x16xbf16>, vector<9x16xbf16>, vector<9x16xbf16>, vector<9x16xbf16>, vector<9x16xbf16> -> vector<72x16xbf16>
    %c0_11 = arith.constant 0 : index
    %c0_12 = arith.constant 0 : index
    %47 = vector.load %arg5[%c0_11, %c0_12] : memref<16x16xbf16, #tpu.memory_space<vmem>>, vector<16x16xbf16>
    %c0_13 = arith.constant 0 : index
    %c0_14 = arith.constant 0 : index
    %48 = vector.load %arg6[%c0_13, %c0_14] : memref<16x16xbf16, #tpu.memory_space<vmem>>, vector<16x16xbf16>
    %cst_15 = arith.constant dense<0.000000e+00> : vector<72x16xf32>
    %49 = tpu.matmul %37, %47, %cst_15 {dimension_numbers = #tpu.dot_dimension_numbers<[1], [0], [0], [1], [0, 0, 1, 1], [], []>} : vector<72x16xbf16>, vector<16x16xbf16>, vector<72x16xf32> -> vector<72x16xf32>
    %cst_16 = arith.constant dense<0.000000e+00> : vector<72x16xf32>
    %50 = tpu.matmul %46, %48, %cst_16 {dimension_numbers = #tpu.dot_dimension_numbers<[1], [0], [0], [1], [0, 0, 1, 1], [], []>} : vector<72x16xbf16>, vector<16x16xbf16>, vector<72x16xf32> -> vector<72x16xf32>
    %51 = arith.addf %49, %50 : vector<72x16xf32>
    %cst_17 = arith.constant dense<0.000000e+00> : vector<72x16xf32>
    %52 = tpu.matmul %46, %47, %cst_17 {dimension_numbers = #tpu.dot_dimension_numbers<[1], [0], [0], [1], [0, 0, 1, 1], [], []>} : vector<72x16xbf16>, vector<16x16xbf16>, vector<72x16xf32> -> vector<72x16xf32>
    %cst_18 = arith.constant dense<0.000000e+00> : vector<72x16xf32>
    %53 = tpu.matmul %37, %48, %cst_18 {dimension_numbers = #tpu.dot_dimension_numbers<[1], [0], [0], [1], [0, 0, 1, 1], [], []>} : vector<72x16xbf16>, vector<16x16xbf16>, vector<72x16xf32> -> vector<72x16xf32>
    %54 = arith.subf %52, %53 : vector<72x16xf32>
    %55 = math.absf %51 : vector<72x16xf32>
    %56 = math.absf %54 : vector<72x16xf32>
    %57 = arith.addf %55, %56 : vector<72x16xf32>
    %58 = tpu.iota {dimensions = array<i32: 0>} : vector<9x1xi32>
    %c0_i32 = arith.constant 0 : i32
    %59 = vector.broadcast %c0_i32 : i32 to vector<9x1xi32>
    %60 = arith.cmpi eq, %58, %59 : vector<9x1xi32>
    %c8_i32 = arith.constant 8 : i32
    %61 = vector.broadcast %c8_i32 : i32 to vector<9x1xi32>
    %62 = arith.cmpi eq, %58, %61 : vector<9x1xi32>
    %63 = arith.ori %60, %62 : vector<9x1xi1>
    %cst_19 = arith.constant 1.000000e+00 : f32
    %cst_20 = arith.constant 2.000000e+00 : f32
    %64 = vector.broadcast %cst_19 : f32 to vector<9x1xf32>
    %65 = vector.broadcast %cst_20 : f32 to vector<9x1xf32>
    %66 = arith.select %63, %64, %65 : vector<9x1xi1>, vector<9x1xf32>
    %67 = tpu.concatenate %66, %66, %66, %66, %66, %66, %66, %66 in 0 : vector<9x1xf32>, vector<9x1xf32>, vector<9x1xf32>, vector<9x1xf32>, vector<9x1xf32>, vector<9x1xf32>, vector<9x1xf32>, vector<9x1xf32> -> vector<72x1xf32>
    %68 = vector.broadcast %67 : vector<72x1xf32> to vector<72x16xf32>
    %69 = arith.mulf %57, %68 : vector<72x16xf32>
    %cst_21 = arith.constant dense<0.000000e+00> : vector<16xf32>
    %70 = vector.multi_reduction <add>, %69, %cst_21 [0] : vector<72x16xf32> to vector<16xf32>
    %71 = vector.shape_cast %70 : vector<16xf32> to vector<1x16xf32>
    %c0_22 = arith.constant 0 : index
    %c0_23 = arith.constant 0 : index
    %c0_24 = arith.constant 0 : index
    %72 = vector.load %arg7[%c0_22, %c0_23, %c0_24] : memref<1x1x16xf32, #tpu.memory_space<vmem>>, vector<1x1x16xf32>
    %73 = vector.shape_cast %72 : vector<1x1x16xf32> to vector<1x16xf32>
    %74 = vector.shape_cast %71 : vector<1x16xf32> to vector<1x1x16xf32>
    tpu.vector_store %arg7[%c0_22, %c0_23, %c0_24], %74 {strides = array<i32>} : memref<1x1x16xf32, #tpu.memory_space<vmem>>, vector<1x1x16xf32>,
    return
  }
  func.func @transform_0(%arg0: i32) -> (i32, i32, i32) {
    %c0_i32 = arith.constant 0 : i32
    %c0_i32_0 = arith.constant 0 : i32
    %c0_i32_1 = arith.constant 0 : i32
    return %arg0, %c0_i32, %c0_i32_0 : i32, i32, i32
  }
  func.func @transform_1(%arg0: i32) -> (i32, i32, i32) {
    %c0_i32 = arith.constant 0 : i32
    %c0_i32_0 = arith.constant 0 : i32
    %c0_i32_1 = arith.constant 0 : i32
    return %arg0, %c0_i32, %c0_i32_0 : i32, i32, i32
  }
  func.func @transform_2(%arg0: i32) -> (i32, i32) {
    %c0_i32 = arith.constant 0 : i32
    %c0_i32_0 = arith.constant 0 : i32
    %c0_i32_1 = arith.constant 0 : i32
    return %c0_i32, %c0_i32_0 : i32, i32
  }
  func.func @transform_3(%arg0: i32) -> (i32, i32) {
    %c0_i32 = arith.constant 0 : i32
    %c0_i32_0 = arith.constant 0 : i32
    %c0_i32_1 = arith.constant 0 : i32
    return %c0_i32, %c0_i32_0 : i32, i32
  }
  func.func @transform_4(%arg0: i32) -> (i32, i32) {
    %c0_i32 = arith.constant 0 : i32
    %c0_i32_0 = arith.constant 0 : i32
    %c0_i32_1 = arith.constant 0 : i32
    return %c0_i32, %c0_i32_0 : i32, i32
  }
  func.func @transform_5(%arg0: i32) -> (i32, i32) {
    %c0_i32 = arith.constant 0 : i32
    %c0_i32_0 = arith.constant 0 : i32
    %c0_i32_1 = arith.constant 0 : i32
    return %c0_i32, %c0_i32_0 : i32, i32
  }
  func.func @transform_6(%arg0: i32) -> (i32, i32, i32) {
    %c0_i32 = arith.constant 0 : i32
    %c0_i32_0 = arith.constant 0 : i32
    %c0_i32_1 = arith.constant 0 : i32
    return %arg0, %c0_i32, %c0_i32_0 : i32, i32, i32
  }
}

</mosaic_0001>

<llo_original>
// kernel: fft_loss.1
$region0: #{fft_loss.1}
  #allocation0 [shape = 'u32[]', space=smem, size = 0x4, offset = 0x4, fixed_abs, tag = 'smem constant byte address 0x4 - core index']
  #allocation1 [shape = 'u32[72,128]{1,0:T(1,128)}', space=vmem, size = 0x9000, scoped, tag = 'internal scratch']
  %s0 = inlined_call_operand.hbm [shape: f32[8,16,16], index: 0, kind: input, shape index: {}]
  %s1 = inlined_call_operand.hbm [shape: f32[8,16,16], index: 1, kind: input, shape index: {}]
  %s2 = inlined_call_operand.vmem [shape: bf16[9,16], index: 2, kind: input, shape index: {}, may-alias: {2,4}]
  %s3 = inlined_call_operand.vmem [shape: bf16[9,16], index: 3, kind: input, shape index: {}, may-alias: {3,5}]
  %s4 = inlined_call_operand.vmem [shape: bf16[16,16], index: 4, kind: input, shape index: {}, may-alias: {2,4}]
  %s5 = inlined_call_operand.vmem [shape: bf16[16,16], index: 5, kind: input, shape index: {}, may-alias: {3,5}]
  %s6 = inlined_call_operand.vmem [shape: f32[1,1,16], index: 6, kind: output, shape index: {}]
  %s7 = sld [smem:[#allocation0]]
  $region42: #{fft_loss.1} parent=0
    _
  %s9 = ssub.s32 1, %s7
  %s10 = scalar_select 0, %s9, %s7
  $region1: #{fft_loss.1} parent=0
    #allocation2 [shape = 'u8[65536]{0}', space=vmem, size = 0x10000, scoped, tag = 'input window, operand 0, single buffered']
    #allocation3 [shape = 's32[1]{0}', space=sflag, size = 0x4, scoped, tag = 'scoped memory for fft_loss.1']
    #allocation4 [shape = 'u8[65536]{0}', space=vmem, size = 0x10000, scoped, tag = 'input window, operand 1, single buffered']
    #allocation5 [shape = 's32[1]{0}', space=sflag, size = 0x4, scoped, tag = 'scoped memory for fft_loss.1']
    %11 = vsyncpa [#allocation3], 0
    %12 = vsyncpa [#allocation5], 0
    // Predicated region
    $region2: #{fft_loss.1} parent=1 // pred_check
      _
    $region3: #{fft_loss.1} parent=1 // pred_check_branch
      %14 = sbr.rel (0) target = $region5
    $region4: #{fft_loss.1} parent=1 // pred_region
      %16 = vsyncadd [#allocation3], 0
      %s17 = sshll.u32 %s0, 4
      %s18 = int_to_ptr.hbm [resolvable:$true] %s17
      %s19 = sshll.u32 [#allocation2], 4
      %s20 = int_to_ptr.vmem [resolvable:$true] %s19
      %25 = dma.hbm_to_vmem [thread:$0]  %s18, 2048, %s20, [#allocation3], 128, 128, 8
    $region5: #{fft_loss.1} parent=1 // pred_fallthru
      _
    // Predicated region
    $region6: #{fft_loss.1} parent=1 // pred_check
      _
    $region7: #{fft_loss.1} parent=1 // pred_check_branch
      %27 = sbr.rel (0) target = $region9
    $region8: #{fft_loss.1} parent=1 // pred_region
      %29 = vsyncadd [#allocation5], 0
      %s30 = sshll.u32 %s1, 4
      %s31 = int_to_ptr.hbm [resolvable:$true] %s30
      %s32 = sshll.u32 [#allocation4], 4
      %s33 = int_to_ptr.vmem [resolvable:$true] %s32
      %38 = dma.hbm_to_vmem [thread:$0]  %s31, 2048, %s33, [#allocation5], 128, 128, 8
    $region9: #{fft_loss.1} parent=1 // pred_fallthru
      _
    // Predicated region
    $region10: #{fft_loss.1} parent=1 // pred_check
      _
    $region11: #{fft_loss.1} parent=1 // pred_check_branch
      %40 = sbr.rel (0) target = $region13
    $region12: #{fft_loss.1} parent=1 // pred_region
      _
    $region13: #{fft_loss.1} parent=1 // pred_fallthru
      _
    // Predicated region
    $region14: #{fft_loss.1} parent=1 // pred_check
      _
    $region15: #{fft_loss.1} parent=1 // pred_check_branch
      %42 = sbr.rel (0) target = $region17
    $region16: #{fft_loss.1} parent=1 // pred_region
      _
    $region17: #{fft_loss.1} parent=1 // pred_fallthru
      _
    // Predicated region
    $region18: #{fft_loss.1} parent=1 // pred_check
      _
    $region19: #{fft_loss.1} parent=1 // pred_check_branch
      %44 = sbr.rel (0) target = $region21
    $region20: #{fft_loss.1} parent=1 // pred_region
      _
    $region21: #{fft_loss.1} parent=1 // pred_fallthru
      _
    // Predicated region
    $region22: #{fft_loss.1} parent=1 // pred_check
      _
    $region23: #{fft_loss.1} parent=1 // pred_check_branch
      %46 = sbr.rel (0) target = $region25
    $region24: #{fft_loss.1} parent=1 // pred_region
      _
    $region25: #{fft_loss.1} parent=1 // pred_fallthru
      _
    // Predicated region
    $region26: #{fft_loss.1} parent=1 // pred_check
      _
    $region27: #{fft_loss.1} parent=1 // pred_check_branch
      %48 = sbr.rel (0) target = $region29
    $region28: #{fft_loss.1} parent=1 // pred_region
      %50 = dma.done [#allocation3], 2048
    $region29: #{fft_loss.1} parent=1 // pred_fallthru
      _
    // Predicated region
    $region30: #{fft_loss.1} parent=1 // pred_check
      _
    $region31: #{fft_loss.1} parent=1 // pred_check_branch
      %52 = sbr.rel (0) target = $region33
    $region32: #{fft_loss.1} parent=1 // pred_region
      %54 = dma.done [#allocation5], 2048
    $region33: #{fft_loss.1} parent=1 // pred_fallthru
      _
    %v56 = vld [vmem:[#allocation2] sm:$0xff]
    %v57 = vld [vmem:[#allocation2 + $0x8] sm:$0xff]
    %v58 = vld [vmem:[#allocation2 + $0x10] sm:$0xff]
    %v59 = vld [vmem:[#allocation2 + $0x18] sm:$0xff]
    %v60 = vld [vmem:[#allocation2 + $0x20] sm:$0xff]
    %v61 = vld [vmem:[#allocation2 + $0x28] sm:$0xff]
    %v62 = vld [vmem:[#allocation2 + $0x30] sm:$0xff]
    %v63 = vld [vmem:[#allocation2 + $0x38] sm:$0xff]
    %v64 = vld [vmem:[#allocation2 + $0x40] sm:$0xff]
    %v65 = vld [vmem:[#allocation2 + $0x48] sm:$0xff]
    %v66 = vld [vmem:[#allocation2 + $0x50] sm:$0xff]
    %v67 = vld [vmem:[#allocation2 + $0x58] sm:$0xff]
    %v68 = vld [vmem:[#allocation2 + $0x60] sm:$0xff]
    %v69 = vld [vmem:[#allocation2 + $0x68] sm:$0xff]
    %v70 = vld [vmem:[#allocation2 + $0x70] sm:$0xff]
    %v71 = vld [vmem:[#allocation2 + $0x78] sm:$0xff]
    %v72 = vld [vmem:[#allocation4] sm:$0xff]
    %v73 = vld [vmem:[#allocation4 + $0x8] sm:$0xff]
    %v74 = vld [vmem:[#allocation4 + $0x10] sm:$0xff]
    %v75 = vld [vmem:[#allocation4 + $0x18] sm:$0xff]
    %v76 = vld [vmem:[#allocation4 + $0x20] sm:$0xff]
    %v77 = vld [vmem:[#allocation4 + $0x28] sm:$0xff]
    %v78 = vld [vmem:[#allocation4 + $0x30] sm:$0xff]
    %v79 = vld [vmem:[#allocation4 + $0x38] sm:$0xff]
    %v80 = vld [vmem:[#allocation4 + $0x40] sm:$0xff]
    %v81 = vld [vmem:[#allocation4 + $0x48] sm:$0xff]
    %v82 = vld [vmem:[#allocation4 + $0x50] sm:$0xff]
    %v83 = vld [vmem:[#allocation4 + $0x58] sm:$0xff]
    %v84 = vld [vmem:[#allocation4 + $0x60] sm:$0xff]
    %v85 = vld [vmem:[#allocation4 + $0x68] sm:$0xff]
    %v86 = vld [vmem:[#allocation4 + $0x70] sm:$0xff]
    %v87 = vld [vmem:[#allocation4 + $0x78] sm:$0xff]
    %v88 = vsub.f32 %v56, %v72
    %v89 = vsub.f32 %v57, %v73
    %v90 = vsub.f32 %v58, %v74
    %v91 = vsub.f32 %v59, %v75
    %v92 = vsub.f32 %v60, %v76
    %v93 = vsub.f32 %v61, %v77
    %v94 = vsub.f32 %v62, %v78
    %v95 = vsub.f32 %v63, %v79
    %v96 = vsub.f32 %v64, %v80
    %v97 = vsub.f32 %v65, %v81
    %v98 = vsub.f32 %v66, %v82
    %v99 = vsub.f32 %v67, %v83
    %v100 = vsub.f32 %v68, %v84
    %v101 = vsub.f32 %v69, %v85
    %v102 = vsub.f32 %v70, %v86
    %v103 = vsub.f32 %v71, %v87
    %v104 = vpack.c.bf16 %v88, %v88
    %v105 = vpack.c.bf16 %v89, %v89
    %v106 = vpack.c.bf16 %v90, %v90
    %v107 = vpack.c.bf16 %v91, %v91
    %v108 = vpack.c.bf16 %v92, %v92
    %v109 = vpack.c.bf16 %v93, %v93
    %v110 = vpack.c.bf16 %v94, %v94
    %v111 = vpack.c.bf16 %v95, %v95
    %v112 = vpack.c.bf16 %v96, %v96
    %v113 = vpack.c.bf16 %v97, %v97
    %v114 = vpack.c.bf16 %v98, %v98
    %v115 = vpack.c.bf16 %v99, %v99
    %v116 = vpack.c.bf16 %v100, %v100
    %v117 = vpack.c.bf16 %v101, %v101
    %v118 = vpack.c.bf16 %v102, %v102
    %v119 = vpack.c.bf16 %v103, %v103
    %v122 = vunpack.c.l.b16 %v104
    %v123 = vunpack.c.l.b16 %v105
    %v124 = vpack.c.b16 %v123, %v122
    %v127 = vunpack.c.l.b16 %v106
    %v128 = vunpack.c.l.b16 %v107
    %v129 = vpack.c.b16 %v128, %v127
    %130 = vrot.lane.b32.xlu0 %v129, 16
    %v131 = vpop.permute.xlu0 %130
    %v134 = vunpack.c.l.b16 %v108
    %v135 = vunpack.c.l.b16 %v109
    %v136 = vpack.c.b16 %v135, %v134
    %137 = vrot.lane.b32.xlu0 %v136, 32
    %v138 = vpop.permute.xlu0 %137
    %v141 = vunpack.c.l.b16 %v110
    %v142 = vunpack.c.l.b16 %v111
    %v143 = vpack.c.b16 %v142, %v141
    %144 = vrot.lane.b32.xlu0 %v143, 48
    %v145 = vpop.permute.xlu0 %144
    %v148 = vunpack.c.l.b16 %v112
    %v149 = vunpack.c.l.b16 %v113
    %v150 = vpack.c.b16 %v149, %v148
    %151 = vrot.lane.b32.xlu0 %v150, 64
    %v152 = vpop.permute.xlu0 %151
    %v155 = vunpack.c.l.b16 %v114
    %v156 = vunpack.c.l.b16 %v115
    %v157 = vpack.c.b16 %v156, %v155
    %158 = vrot.lane.b32.xlu0 %v157, 80
    %v159 = vpop.permute.xlu0 %158
    %v162 = vunpack.c.l.b16 %v116
    %v163 = vunpack.c.l.b16 %v117
    %v164 = vpack.c.b16 %v163, %v162
    %165 = vrot.lane.b32.xlu0 %v164, 96
    %v166 = vpop.permute.xlu0 %165
    %v169 = vunpack.c.l.b16 %v118
    %v170 = vunpack.c.l.b16 %v119
    %v171 = vpack.c.b16 %v170, %v169
    %172 = vrot.lane.b32.xlu0 %v171, 112
    %v173 = vpop.permute.xlu0 %172
    %vm174 = vcmask 130048
    %v177 = vsel %vm174, %v124, %v131
    %vm178 = vcmask 261120
    %v180 = vsel %vm178, %v177, %v138
    %vm181 = vcmask 392192
    %v183 = vsel %vm181, %v180, %v145
    %vm184 = vcmask 523264
    %v186 = vsel %vm184, %v183, %v152
    %vm187 = vcmask 654336
    %v189 = vsel %vm187, %v186, %v159
    %vm190 = vcmask 785408
    %v192 = vsel %vm190, %v189, %v166
    %vm193 = vcmask 916480
    %v195 = vsel %vm193, %v192, %v173
    %v197 = vld [vmem:[%s2] sm:$0xf]
    %v198 = vld [vmem:[%s2 + $0x4] sm:$0x1]
    %v199 = vld [vmem:[%s3] sm:$0xf]
    %v200 = vld [vmem:[%s3 + $0x4] sm:$0x1]
    %v203 = vunpack.c.l.b16 %v197
    %v204 = vunpack.c.l.b16 %v198
    %v205 = vpack.c.b16 %v204, %v203
    %v207 = vsel %vm174, %v205, 0
    %209 = vmatpush.bf16.msra.mxu0 0
    %210 = vmatpush.bf16.msra.mxu0 0
    %211 = vmatpush.bf16.msra.mxu0 0
    %212 = vmatpush.bf16.msra.mxu0 0
    %213 = vmatpush.bf16.msra.mxu0 0
    %214 = vmatpush.bf16.msra.mxu0 0
    %215 = vmatpush.bf16.msra.mxu0 0
    %216 = vmatpush.bf16.msra.mxu0 %v195
    %217 = vmatmul.bf16.gmra.mxu0 %v207
    %v218 = vpop.f32.mrf.mxu0
    %v219 = vadd.f32 0.0, %v218
    %v220 = vpop.f32.mrf.mxu0
    %v221 = vadd.f32 0.0, %v220
    %222 = vdwg.mxu0
    %v225 = vunpack.c.l.b16 %v199
    %v226 = vunpack.c.l.b16 %v200
    %v227 = vpack.c.b16 %v226, %v225
    %v229 = vsel %vm174, %v227, 0
    %231 = vmatpush.bf16.msra.mxu0 0
    %232 = vmatpush.bf16.msra.mxu0 0
    %233 = vmatpush.bf16.msra.mxu0 0
    %234 = vmatpush.bf16.msra.mxu0 0
    %235 = vmatpush.bf16.msra.mxu0 0
    %236 = vmatpush.bf16.msra.mxu0 0
    %237 = vmatpush.bf16.msra.mxu0 0
    %238 = vmatpush.bf16.msra.mxu0 %v195
    %239 = vmatmul.bf16.gmra.mxu0 %v229
    %v240 = vpop.f32.mrf.mxu0
    %v241 = vadd.f32 0.0, %v240
    %v242 = vpop.f32.mrf.mxu0
    %v243 = vadd.f32 0.0, %v242
    %244 = vdwg.mxu0
    %v245 = vsub.f32 0.0, %v241
    %v246 = vsub.f32 0.0, %v243
    %v247 = vpack.c.bf16 %v219, %v219
    %v248 = vpack.c.bf16 %v221, %v221
    %v249 = vpack.c.bf16 %v245, %v245
    %v250 = vpack.c.bf16 %v246, %v246
    %v253 = vunpack.c.l.b16 %v247
    %v254 = vunpack.c.l.b16 %v248
    %v255 = vpack.c.b16 %v254, %v253
    %v258 = vshrl.u32 %v255, 16
    %v260 = vrot.slane %v258, 3
    %v261 = vshll.u32 %v255, 16
    %v263 = vrot.slane %v261, 4
    %v264 = vor.u32 %v260, %v263
    %265 = vrot.lane.b32.xlu0 %v264, 112
    %v266 = vpop.permute.xlu0 %265
    %v268 = vrot.slane %v255, 7
    %269 = vrot.lane.b32.xlu0 %v268, 96
    %v270 = vpop.permute.xlu0 %269
    %v271 = vrot.slane %v258, 2
    %v272 = vrot.slane %v261, 3
    %v273 = vor.u32 %v271, %v272
    %274 = vrot.lane.b32.xlu0 %v273, 80
    %v275 = vpop.permute.xlu0 %274
    %v277 = vrot.slane %v255, 6
    %278 = vrot.lane.b32.xlu0 %v277, 64
    %v279 = vpop.permute.xlu0 %278
    %v280 = vrot.slane %v258, 1
    %v281 = vrot.slane %v261, 2
    %v282 = vor.u32 %v280, %v281
    %283 = vrot.lane.b32.xlu0 %v282, 48
    %v284 = vpop.permute.xlu0 %283
    %v286 = vrot.slane %v255, 5
    %287 = vrot.lane.b32.xlu0 %v286, 32
    %v288 = vpop.permute.xlu0 %287
    %v289 = vrot.slane %v261, 1
    %v290 = vor.u32 %v258, %v289
    %291 = vrot.lane.b32.xlu0 %v289, 16
    %v292 = vpop.permute.xlu0 %291
    %293 = vrot.lane.b32.xlu0 %v290, 16
    %v294 = vpop.permute.xlu0 %293
    %vm296 = vcmask 1044480
    %vm297 = vsmask.f32 4352
    %vm298 = vmand %vm296, %vm297
    %v299 = vsel %vm298, %v255, %v266
    %vm300 = vcmask 1040384
    %v303 = vsel %vm300, %v266, %v270
    %vm305 = vcmask 1045504
    %vm306 = vsmask.f32 5376
    %vm307 = vmand %vm305, %vm306
    %v308 = vsel %vm307, %v303, %v275
    %vm309 = vcmask 1041408
    %v312 = vsel %vm309, %v275, %v279
    %vm314 = vcmask 1046528
    %vm315 = vsmask.f32 6400
    %vm316 = vmand %vm314, %vm315
    %v317 = vsel %vm316, %v312, %v284
    %vm318 = vcmask 1042432
    %v321 = vsel %vm318, %v284, %v288
    %vm323 = vcmask 1047552
    %vm324 = vsmask.f32 7424
    %vm325 = vmand %vm323, %vm324
    %v326 = vsel %vm325, %v321, %v292
    %v329 = vunpack.c.l.b16 %v249
    %v330 = vunpack.c.l.b16 %v250
    %v331 = vpack.c.b16 %v330, %v329
    %v334 = vshrl.u32 %v331, 16
    %v336 = vrot.slane %v334, 3
    %v337 = vshll.u32 %v331, 16
    %v339 = vrot.slane %v337, 4
    %v340 = vor.u32 %v336, %v339
    %341 = vrot.lane.b32.xlu0 %v340, 112
    %v342 = vpop.permute.xlu0 %341
    %v344 = vrot.slane %v331, 7
    %345 = vrot.lane.b32.xlu0 %v344, 96
    %v346 = vpop.permute.xlu0 %345
    %v347 = vrot.slane %v334, 2
    %v348 = vrot.slane %v337, 3
    %v349 = vor.u32 %v347, %v348
    %350 = vrot.lane.b32.xlu0 %v349, 80
    %v351 = vpop.permute.xlu0 %350
    %v353 = vrot.slane %v331, 6
    %354 = vrot.lane.b32.xlu0 %v353, 64
    %v355 = vpop.permute.xlu0 %354
    %v356 = vrot.slane %v334, 1
    %v357 = vrot.slane %v337, 2
    %v358 = vor.u32 %v356, %v357
    %359 = vrot.lane.b32.xlu0 %v358, 48
    %v360 = vpop.permute.xlu0 %359
    %v362 = vrot.slane %v331, 5
    %363 = vrot.lane.b32.xlu0 %v362, 32
    %v364 = vpop.permute.xlu0 %363
    %v365 = vrot.slane %v337, 1
    %v366 = vor.u32 %v334, %v365
    %367 = vrot.lane.b32.xlu0 %v365, 16
    %v368 = vpop.permute.xlu0 %367
    %369 = vrot.lane.b32.xlu0 %v366, 16
    %v370 = vpop.permute.xlu0 %369
    %v372 = vsel %vm298, %v331, %v342
    %v375 = vsel %vm300, %v342, %v346
    %v377 = vsel %vm307, %v375, %v351
    %v380 = vsel %vm309, %v351, %v355
    %v382 = vsel %vm316, %v380, %v360
    %v385 = vsel %vm318, %v360, %v364
    %v387 = vsel %vm325, %v385, %v368
    %v388 = vld [vmem:[%s4] sm:$0xf]
    %v389 = vld [vmem:[%s4 + $0x4] sm:$0xf]
    %v390 = vld [vmem:[%s5] sm:$0xf]
    %v391 = vld [vmem:[%s5 + $0x4] sm:$0xf]
    %v394 = vunpack.c.l.b16 %v390
    %v395 = vunpack.c.l.b16 %v391
    %v396 = vpack.c.b16 %v395, %v394
    %v399 = vsel %vm174, %v372, 0
    %v402 = vsel %vm174, %v377, 0
    %v405 = vsel %vm174, %v382, 0
    %v408 = vsel %vm174, %v387, 0
    %v411 = vsel %vm174, %v370, 0
    %413 = vmatpush.bf16.msra.mxu0 0
    %414 = vmatpush.bf16.msra.mxu0 0
    %415 = vmatpush.bf16.msra.mxu0 0
    %416 = vmatpush.bf16.msra.mxu0 0
    %417 = vmatpush.bf16.msra.mxu0 0
    %418 = vmatpush.bf16.msra.mxu0 0
    %419 = vmatpush.bf16.msra.mxu0 0
    %420 = vmatpush.bf16.msra.mxu0 %v396
    %421 = vmatmul.bf16.gmra.mxu0 %v399
    %v422 = vpop.f32.mrf.mxu0
    %v423 = vadd.f32 0.0, %v422
    %v424 = vpop.f32.mrf.mxu0
    %v425 = vadd.f32 0.0, %v424
    %426 = vmatmul.bf16.gmra.mxu0 %v402
    %v427 = vpop.f32.mrf.mxu0
    %v428 = vadd.f32 0.0, %v427
    %v429 = vpop.f32.mrf.mxu0
    %v430 = vadd.f32 0.0, %v429
    %431 = vmatmul.bf16.gmra.mxu0 %v405
    %v432 = vpop.f32.mrf.mxu0
    %v433 = vadd.f32 0.0, %v432
    %v434 = vpop.f32.mrf.mxu0
    %v435 = vadd.f32 0.0, %v434
    %436 = vmatmul.bf16.gmra.mxu0 %v408
    %v437 = vpop.f32.mrf.mxu0
    %v438 = vadd.f32 0.0, %v437
    %v439 = vpop.f32.mrf.mxu0
    %v440 = vadd.f32 0.0, %v439
    %441 = vmatmul.bf16.gmra.mxu0 %v411
    %v442 = vpop.f32.mrf.mxu0
    %v443 = vadd.f32 0.0, %v442
    %v444 = vpop.f32.mrf.mxu0
    %445 = vdwg.mxu0
    %v448 = vunpack.c.l.b16 %v388
    %v449 = vunpack.c.l.b16 %v389
    %v450 = vpack.c.b16 %v449, %v448
    %v453 = vsel %vm174, %v299, 0
    %v456 = vsel %vm174, %v308, 0
    %v459 = vsel %vm174, %v317, 0
    %v462 = vsel %vm174, %v326, 0
    %v465 = vsel %vm174, %v294, 0
    %467 = vmatpush.bf16.msra.mxu0 0
    %468 = vmatpush.bf16.msra.mxu0 0
    %469 = vmatpush.bf16.msra.mxu0 0
    %470 = vmatpush.bf16.msra.mxu0 0
    %471 = vmatpush.bf16.msra.mxu0 0
    %472 = vmatpush.bf16.msra.mxu0 0
    %473 = vmatpush.bf16.msra.mxu0 0
    %474 = vmatpush.bf16.msra.mxu0 %v450
    %475 = vmatmul.bf16.gmra.mxu0 %v453
    %v476 = vpop.f32.mrf.mxu0
    %v477 = vadd.f32 %v423, %v476
    %v478 = vpop.f32.mrf.mxu0
    %v479 = vadd.f32 %v425, %v478
    %480 = vmatmul.bf16.gmra.mxu0 %v456
    %v481 = vpop.f32.mrf.mxu0
    %v482 = vadd.f32 %v428, %v481
    %v483 = vpop.f32.mrf.mxu0
    %v484 = vadd.f32 %v430, %v483
    %485 = vmatmul.bf16.gmra.mxu0 %v459
    %v486 = vpop.f32.mrf.mxu0
    %v487 = vadd.f32 %v433, %v486
    %v488 = vpop.f32.mrf.mxu0
    %v489 = vadd.f32 %v435, %v488
    %490 = vmatmul.bf16.gmra.mxu0 %v462
    %v491 = vpop.f32.mrf.mxu0
    %v492 = vadd.f32 %v438, %v491
    %v493 = vpop.f32.mrf.mxu0
    %v494 = vadd.f32 %v440, %v493
    %495 = vmatmul.bf16.gmra.mxu0 %v465
    %v496 = vpop.f32.mrf.mxu0
    %v497 = vadd.f32 %v443, %v496
    %v498 = vpop.f32.mrf.mxu0
    %499 = vdwg.mxu0
    %500 = vmatpush.bf16.msra.mxu0 0
    %501 = vmatpush.bf16.msra.mxu0 0
    %502 = vmatpush.bf16.msra.mxu0 0
    %503 = vmatpush.bf16.msra.mxu0 0
    %504 = vmatpush.bf16.msra.mxu0 0
    %505 = vmatpush.bf16.msra.mxu0 0
    %506 = vmatpush.bf16.msra.mxu0 0
    %507 = vmatpush.bf16.msra.mxu0 %v450
    %508 = vmatmul.bf16.gmra.mxu0 %v399
    %v509 = vpop.f32.mrf.mxu0
    %v510 = vadd.f32 0.0, %v509
    %v511 = vpop.f32.mrf.mxu0
    %v512 = vadd.f32 0.0, %v511
    %513 = vmatmul.bf16.gmra.mxu0 %v402
    %v514 = vpop.f32.mrf.mxu0
    %v515 = vadd.f32 0.0, %v514
    %v516 = vpop.f32.mrf.mxu0
    %v517 = vadd.f32 0.0, %v516
    %518 = vmatmul.bf16.gmra.mxu0 %v405
    %v519 = vpop.f32.mrf.mxu0
    %v520 = vadd.f32 0.0, %v519
    %v521 = vpop.f32.mrf.mxu0
    %v522 = vadd.f32 0.0, %v521
    %523 = vmatmul.bf16.gmra.mxu0 %v408
    %v524 = vpop.f32.mrf.mxu0
    %v525 = vadd.f32 0.0, %v524
    %v526 = vpop.f32.mrf.mxu0
    %v527 = vadd.f32 0.0, %v526
    %528 = vmatmul.bf16.gmra.mxu0 %v411
    %v529 = vpop.f32.mrf.mxu0
    %v530 = vadd.f32 0.0, %v529
    %v531 = vpop.f32.mrf.mxu0
    %532 = vdwg.mxu0
    %533 = vmatpush.bf16.msra.mxu0 0
    %534 = vmatpush.bf16.msra.mxu0 0
    %535 = vmatpush.bf16.msra.mxu0 0
    %536 = vmatpush.bf16.msra.mxu0 0
    %537 = vmatpush.bf16.msra.mxu0 0
    %538 = vmatpush.bf16.msra.mxu0 0
    %539 = vmatpush.bf16.msra.mxu0 0
    %540 = vmatpush.bf16.msra.mxu0 %v396
    %541 = vmatmul.bf16.gmra.mxu0 %v453
    %v542 = vpop.f32.mrf.mxu0
    %v543 = vadd.f32 0.0, %v542
    %v544 = vpop.f32.mrf.mxu0
    %v545 = vadd.f32 0.0, %v544
    %546 = vmatmul.bf16.gmra.mxu0 %v456
    %v547 = vpop.f32.mrf.mxu0
    %v548 = vadd.f32 0.0, %v547
    %v549 = vpop.f32.mrf.mxu0
    %v550 = vadd.f32 0.0, %v549
    %551 = vmatmul.bf16.gmra.mxu0 %v459
    %v552 = vpop.f32.mrf.mxu0
    %v553 = vadd.f32 0.0, %v552
    %v554 = vpop.f32.mrf.mxu0
    %v555 = vadd.f32 0.0, %v554
    %556 = vmatmul.bf16.gmra.mxu0 %v462
    %v557 = vpop.f32.mrf.mxu0
    %v558 = vadd.f32 0.0, %v557
    %v559 = vpop.f32.mrf.mxu0
    %v560 = vadd.f32 0.0, %v559
    %561 = vmatmul.bf16.gmra.mxu0 %v465
    %v562 = vpop.f32.mrf.mxu0
    %v563 = vadd.f32 0.0, %v562
    %v564 = vpop.f32.mrf.mxu0
    %565 = vdwg.mxu0
    %v566 = vsub.f32 %v510, %v543
    %v567 = vsub.f32 %v512, %v545
    %v568 = vsub.f32 %v515, %v548
    %v569 = vsub.f32 %v517, %v550
    %v570 = vsub.f32 %v520, %v553
    %v571 = vsub.f32 %v522, %v555
    %v572 = vsub.f32 %v525, %v558
    %v573 = vsub.f32 %v527, %v560
    %v574 = vsub.f32 %v530, %v563
    %v575 = vand.u32 2147483647, %v477
    %v576 = vand.u32 2147483647, %v479
    %v577 = vand.u32 2147483647, %v482
    %v578 = vand.u32 2147483647, %v484
    %v579 = vand.u32 2147483647, %v487
    %v580 = vand.u32 2147483647, %v489
    %v581 = vand.u32 2147483647, %v492
    %v582 = vand.u32 2147483647, %v494
    %v583 = vand.u32 2147483647, %v497
    %v584 = vand.u32 2147483647, %v566
    %v585 = vand.u32 2147483647, %v567
    %v586 = vand.u32 2147483647, %v568
    %v587 = vand.u32 2147483647, %v569
    %v588 = vand.u32 2147483647, %v570
    %v589 = vand.u32 2147483647, %v571
    %v590 = vand.u32 2147483647, %v572
    %v591 = vand.u32 2147483647, %v573
    %v592 = vand.u32 2147483647, %v574
    %v593 = vadd.f32 %v575, %v584
    %v594 = vadd.f32 %v576, %v585
    %v595 = vadd.f32 %v577, %v586
    %v596 = vadd.f32 %v578, %v587
    %v597 = vadd.f32 %v579, %v588
    %v598 = vadd.f32 %v580, %v589
    %v599 = vadd.f32 %v581, %v590
    %v600 = vadd.f32 %v582, %v591
    %v601 = vadd.f32 %v583, %v592
    %v602 = vlaneseq
    %v603 = vshrl.u32 %v602, 7
    %v604 = vadd.s32 %v603, 8
    %vm605 = vcmp.eq.s32.totalorder %v603, 0
    %vm606 = vcmp.eq.s32.totalorder %v604, 0
    %vm607 = vcmp.eq.s32.totalorder %v603, 8
    %vm608 = vcmp.eq.s32.totalorder %v604, 8
    %vm609 = vmor %vm605, %vm607
    %vm610 = vmor %vm606, %vm608
    %v611 = vsel %vm609, 1.0, 2.0
    %v612 = vsel %vm610, 1.0, 2.0
    %v615 = vrot.slane %v611, 7
    %v616 = vrot.slane %v612, 7
    %v617 = vsel %vm300, %v615, %v616
    %v620 = vrot.slane %v611, 6
    %v621 = vrot.slane %v612, 6
    %v622 = vsel %vm309, %v620, %v621
    %v625 = vrot.slane %v611, 5
    %v626 = vrot.slane %v612, 5
    %v627 = vsel %vm318, %v625, %v626
    %vm630 = vcmask 1043456
    %v631 = vrot.slane %v611, 4
    %v632 = vrot.slane %v612, 4
    %v633 = vsel %vm630, %v631, %v632
    %vm636 = vcmask 1044480
    %v637 = vrot.slane %v611, 3
    %v638 = vrot.slane %v612, 3
    %v639 = vsel %vm636, %v637, %v638
    %vm642 = vcmask 1045504
    %v643 = vrot.slane %v611, 2
    %v644 = vrot.slane %v612, 2
    %v645 = vsel %vm642, %v643, %v644
    %vm648 = vcmask 1046528
    %v649 = vrot.slane %v611, 1
    %v650 = vrot.slane %v612, 1
    %v651 = vsel %vm648, %v649, %v650
    %v653 = vsel %vm300, %v612, %v615
    %v654 = vsel %vm309, %v617, %v620
    %v655 = vsel %vm318, %v622, %v625
    %v656 = vsel %vm630, %v627, %v631
    %v657 = vsel %vm636, %v633, %v637
    %v658 = vsel %vm642, %v639, %v643
    %v659 = vsel %vm648, %v645, %v649
    %660 = vset.pattern.permute.xlu0 0
    %661 = vperm.xlu0 %660, %v611
    %v662 = vpop.permute.xlu0 %661
    %665 = vset.pattern.permute.xlu0 0
    %666 = vperm.xlu0 %665, %v653
    %v667 = vpop.permute.xlu0 %666
    %670 = vset.pattern.permute.xlu0 0
    %671 = vperm.xlu0 %670, %v654
    %v672 = vpop.permute.xlu0 %671
    %675 = vset.pattern.permute.xlu0 0
    %676 = vperm.xlu0 %675, %v655
    %v677 = vpop.permute.xlu0 %676
    %680 = vset.pattern.permute.xlu0 0
    %681 = vperm.xlu0 %680, %v656
    %v682 = vpop.permute.xlu0 %681
    %685 = vset.pattern.permute.xlu0 0
    %686 = vperm.xlu0 %685, %v657
    %v687 = vpop.permute.xlu0 %686
    %690 = vset.pattern.permute.xlu0 0
    %691 = vperm.xlu0 %690, %v658
    %v692 = vpop.permute.xlu0 %691
    %695 = vset.pattern.permute.xlu0 0
    %696 = vperm.xlu0 %695, %v659
    %v697 = vpop.permute.xlu0 %696
    %699 = vset.pattern.permute.xlu0 0
    %700 = vperm.xlu0 %699, %v651
    %v701 = vpop.permute.xlu0 %700
    %v703 = vmul.f32 %v593, %v662
    %v704 = vmul.f32 %v594, %v667
    %v705 = vmul.f32 %v595, %v672
    %v706 = vmul.f32 %v596, %v677
    %v707 = vmul.f32 %v597, %v682
    %v708 = vmul.f32 %v598, %v687
    %v709 = vmul.f32 %v599, %v692
    %v710 = vmul.f32 %v600, %v697
    %v711 = vmul.f32 %v601, %v701
    %v712 = vsel %vm174, %v703, 0.0
    %v713 = vsel %vm174, %v704, 0.0
    %v714 = vadd.f32 %v712, %v713
    %v715 = vsel %vm174, %v705, 0.0
    %v716 = vadd.f32 %v714, %v715
    %v717 = vsel %vm174, %v706, 0.0
    %v718 = vadd.f32 %v716, %v717
    %v719 = vsel %vm174, %v707, 0.0
    %v720 = vadd.f32 %v718, %v719
    %v721 = vsel %vm174, %v708, 0.0
    %v722 = vadd.f32 %v720, %v721
    %v723 = vsel %vm174, %v709, 0.0
    %v724 = vadd.f32 %v722, %v723
    %v725 = vsel %vm174, %v710, 0.0
    %v726 = vadd.f32 %v724, %v725
    %v727 = vsel %vm174, %v711, 0.0
    %v728 = vadd.f32 %v726, %v727
    %v729 = vrot.slane %v728, 4
    %v730 = vadd.f32 %v728, %v729
    %v731 = vrot.slane %v730, 2
    %v732 = vadd.f32 %v730, %v731
    %v733 = vrot.slane %v732, 1
    %v734 = vadd.f32 %v732, %v733
    %vm735 = vcmask 122880
    %736 = vst.msk [vmem:[%s6] sm:$0x1] %vm735, %v734
    // Predicated region
    $region34: #{fft_loss.1} parent=1 // pred_check
      _
    $region35: #{fft_loss.1} parent=1 // pred_check_branch
      %738 = sbr.rel (0) target = $region37
    $region36: #{fft_loss.1} parent=1 // pred_region
      _
    $region37: #{fft_loss.1} parent=1 // pred_fallthru
      _
    // Predicated region
    $region38: #{fft_loss.1} parent=1 // pred_check
      _
    $region39: #{fft_loss.1} parent=1 // pred_check_branch
      %740 = sbr.rel (0) target = $region41
    $region40: #{fft_loss.1} parent=1 // pred_region
      _
    $region41: #{fft_loss.1} parent=1 // pred_fallthru
      _
    %741 = vsyncpa [#allocation3], 1
    %742 = vsyncpa [#allocation5], 1

</llo_original>
